<compile_context>
chip_gen: v7x
topology: tpu7x:2x2x1
jax: 0.10.0
libtpu: 0.0.40
codegen_flags: <defaults>
</compile_context>

<pallas_src>
import jax
import jax.numpy as jnp
from jax import lax
from jax.experimental import pallas as pl
from jax.experimental.pallas import tpu as pltpu


def _round_up(x: int, m: int) -> int:
    return ((x + m - 1) // m) * m


def _pick_tiles(batch: int, hidden: int, d_pad: int, esize: int):
    """Choose (TB, TH) so the double-buffered working set fits comfortably in
    the smallest per-core VMEM across generations (v7x: 64 MiB physical).
    TB is kept as large as possible (fewer full-weight re-reads from HBM);
    TH shrinks first, then TB."""
    tb = min(512, _round_up(batch, 8))
    th = min(512, _round_up(hidden, 128))

    def est(tb_, th_):
        return (2 * th_ * d_pad * esize        # W tile (double-buffered)
                + 2 * tb_ * d_pad * esize      # x tile (double-buffered)
                + tb_ * d_pad * 4              # f32 recon accumulator (scratch)
                + 2 * tb_ * d_pad * 4          # recon output block (dbl-buffered)
                + 2 * tb_ * th_ * 4            # features output block
                + 4 * (4 * th_ + 2 * d_pad))   # inv_norm + biases

    budget = 40 * 1024 * 1024
    while est(tb, th) > budget and th > 128:
        th -= 128
    while est(tb, th) > budget and tb > 8:
        tb = max(8, (tb // 2) // 8 * 8)
    return tb, th


# ---------------------------------------------------------------------------
# Pre-pass: per-row inverse L2 norm of the encoder weight (f32), lane-dense.
# ---------------------------------------------------------------------------
def _inv_norm_kernel(w_ref, inv_ref):
    w = w_ref[...].astype(jnp.float32)                       # [TH, D]
    ones = jnp.ones((1, w.shape[1]), dtype=jnp.float32)
    # Row-wise sum of squares as a (1,D) x (TH,D)^T contraction -> [1, TH]
    sumsq = lax.dot_general(
        ones, w * w, dimension_numbers=(((1,), (1,)), ((), ())),
        preferred_element_type=jnp.float32)
    # 1 / max(||w_row||, 1e-12)  (matches F.normalize eps); rsqrt -> EUP slot.
    inv_ref[...] = lax.rsqrt(jnp.maximum(sumsq, 1e-24))


def _row_inv_norms(w_pad_f32, th, h_pad, d_pad):
    return pl.pallas_call(
        _inv_norm_kernel,
        out_shape=jax.ShapeDtypeStruct((1, h_pad), jnp.float32),
        grid=(h_pad // th,),
        in_specs=[pl.BlockSpec((th, d_pad), lambda h: (h, 0))],
        out_specs=pl.BlockSpec((1, th), lambda h: (0, h)),
        compiler_params=pltpu.CompilerParams(
            dimension_semantics=("parallel",)),
    )(w_pad_f32)


# ---------------------------------------------------------------------------
# Main tiled kernel: encoder + tied decoder with a resident recon accumulator.
# ---------------------------------------------------------------------------
def _sae_tile_kernel(x_ref, w_ref, inv_ref, b_enc_ref, b_dec_ref,
                     feat_ref, recon_ref, acc_ref):
    h = pl.program_id(1)

    @pl.when(h == 0)
    def _():
        acc_ref[...] = jnp.zeros_like(acc_ref)

    x = x_ref[...]                                           # [TB, D]   compute dtype
    w = w_ref[...]                                           # [TH, D]   compute dtype
    inv = inv_ref[...]                                       # [1,  TH]  f32

    # Encoder: (x @ W_tile.T) scaled by inv_norm, + bias, ReLU.
    # NT contraction -> no materialized transpose of the weight tile.
    pre = lax.dot_general(
        x, w, dimension_numbers=(((1,), (1,)), ((), ())),
        preferred_element_type=jnp.float32)                  # [TB, TH] f32
    feats = jnp.maximum(pre * inv + b_enc_ref[...], 0.0)
    feat_ref[...] = feats.astype(feat_ref.dtype)

    # Tied decoder: accumulate (feats * inv_norm) @ W_tile into the f32 scratch.
    fs = (feats * inv).astype(w_ref.dtype)
    acc_ref[...] += jnp.dot(fs, w, preferred_element_type=jnp.float32)

    @pl.when(h == pl.num_programs(1) - 1)
    def _():
        recon_ref[...] = (acc_ref[...] + b_dec_ref[...]).astype(recon_ref.dtype)


def sparse_autoencoder_forward(x, w_enc, b_enc, b_dec, *, compute_dtype=None):
    """features, reconstruction = SparseAutoencoder.forward(x)  (tied weights).

    x: [B, D], w_enc: [H, D] (nn.Linear layout), b_enc: [H], b_dec: [D].
    compute_dtype: dtype fed to the MXU (e.g. jnp.bfloat16); accumulation,
    norms and outputs stay in float32.
    """
    B, D = x.shape
    H, D2 = w_enc.shape
    assert D == D2, "weight / input dim mismatch"
    cdtype = jnp.dtype(compute_dtype) if compute_dtype is not None else jnp.dtype(x.dtype)
    esize = cdtype.itemsize

    d_pad = _round_up(D, 128)
    tb, th = _pick_tiles(B, H, d_pad, esize)
    b_pad = _round_up(B, tb)
    h_pad = _round_up(H, th)

    def pad2(a, rows, cols):
        r, c = a.shape
        if (r, c) == (rows, cols):
            return a
        return jnp.pad(a, ((0, rows - r), (0, cols - c)))

    w_f32 = pad2(w_enc.astype(jnp.float32), h_pad, d_pad)
    x_p = pad2(x, b_pad, d_pad).astype(cdtype)
    w_p = w_f32.astype(cdtype)
    b_enc_p = jnp.pad(b_enc.astype(jnp.float32), (0, h_pad - H)).reshape(1, h_pad)
    b_dec_p = jnp.pad(b_dec.astype(jnp.float32), (0, d_pad - D)).reshape(1, d_pad)

    # Row norms computed once in f32 (not per batch tile, not in bf16).
    inv_norm = _row_inv_norms(w_f32, th, h_pad, d_pad)       # [1, h_pad] f32

    n_b = b_pad // tb
    n_h = h_pad // th

    cost = pl.CostEstimate(
        flops=4 * b_pad * h_pad * d_pad,                     # two matmuls
        transcendentals=0,
        bytes_accessed=(x_p.size * esize
                        + n_b * w_p.size * esize             # W re-read per batch tile
                        + b_pad * h_pad * 4                  # features out
                        + b_pad * d_pad * 4                  # reconstruction out
                        + (2 * h_pad + d_pad) * 4),
    )

    feats, recon = pl.pallas_call(
        _sae_tile_kernel,
        out_shape=(
            jax.ShapeDtypeStruct((b_pad, h_pad), jnp.float32),   # features
            jax.ShapeDtypeStruct((b_pad, d_pad), jnp.float32),   # reconstruction
        ),
        grid=(n_b, n_h),
        in_specs=[
            pl.BlockSpec((tb, d_pad), lambda b, h: (b, 0)),      # x (resident over h)
            pl.BlockSpec((th, d_pad), lambda b, h: (h, 0)),      # W (raw)
            pl.BlockSpec((1, th), lambda b, h: (0, h)),          # inv_norm
            pl.BlockSpec((1, th), lambda b, h: (0, h)),          # b_enc
            pl.BlockSpec((1, d_pad), lambda b, h: (0, 0)),       # b_dec
        ],
        out_specs=[
            pl.BlockSpec((tb, th), lambda b, h: (b, h)),         # features
            pl.BlockSpec((tb, d_pad), lambda b, h: (b, 0)),      # recon (resident over h)
        ],
        scratch_shapes=[pltpu.VMEM((tb, d_pad), jnp.float32)],   # recon accumulator
        compiler_params=pltpu.CompilerParams(
            dimension_semantics=("parallel", "arbitrary"),
            vmem_limit_bytes=48 * 1024 * 1024,
        ),
        cost_estimate=cost,
    )(x_p, w_p, inv_norm, b_enc_p, b_dec_p)

    return feats[:B, :H], recon[:B, :D]


def reference_forward(x, w_enc, b_enc, b_dec):
    """Pure-JAX reference matching the PyTorch module (F.normalize eps=1e-12)."""
    row_norm = jnp.sqrt(jnp.sum(w_enc * w_enc, axis=1, keepdims=True))
    w_n = w_enc / jnp.maximum(row_norm, 1e-12)
    feats = jnp.maximum(x @ w_n.T + b_enc, 0.0)
    recon = feats @ w_n + b_dec
    return feats, recon


if __name__ == "__main__":
    # Small shapes consistent with the module: activations of size `input_size`,
    # hidden dictionary of size `hidden_size`.
    batch = 8
    input_size = 128
    hidden_size = 64

    key = jax.random.PRNGKey(0)
    k_x, k_w = jax.random.split(key)

    # Deterministic init mirroring SparseAutoencoder.initialize_weights():
    # xavier-uniform encoder weight, zero biases.
    bound = (6.0 / (input_size + hidden_size)) ** 0.5
    w_enc = jax.random.uniform(
        k_w, (hidden_size, input_size), minval=-bound, maxval=bound, dtype=jnp.float32
    )
    b_enc = jnp.zeros((hidden_size,), dtype=jnp.float32)   # encoder Linear bias
    b_dec = jnp.zeros((input_size,), dtype=jnp.float32)    # tied-weights decoder bias

    x = jax.random.normal(k_x, (batch, input_size), dtype=jnp.float32)

    # f32 path (exact semantics, tight tolerance).
    features, reconstruction = sparse_autoencoder_forward(x, w_enc, b_enc, b_dec)
    jax.block_until_ready((features, reconstruction))

    feats_ref, recon_ref = reference_forward(x, w_enc, b_enc, b_dec)
    assert features.shape == (batch, hidden_size)
    assert reconstruction.shape == (batch, input_size)
    assert jnp.allclose(features, feats_ref, atol=1e-4, rtol=1e-4)
    assert jnp.allclose(reconstruction, recon_ref, atol=1e-4, rtol=1e-4)

    # bf16 MXU path (f32 accumulation + f32 norms), looser tolerance.
    feats_bf, recon_bf = sparse_autoencoder_forward(
        x, w_enc, b_enc, b_dec, compute_dtype=jnp.bfloat16)
    jax.block_until_ready((feats_bf, recon_bf))
    assert jnp.allclose(feats_bf, feats_ref, atol=5e-2, rtol=5e-2)
    assert jnp.allclose(recon_bf, recon_ref, atol=5e-2, rtol=5e-2)

    print("KERNEL_OK")
</pallas_src>

<mosaic_0001>
module attributes {stable_mosaic.version = 11 : i64} {
  func.func @_inv_norm_kernel(%arg0: i32, %arg1: memref<128x128xf32, #tpu.memory_space<vmem>>, %arg2: memref<1x128xf32, #tpu.memory_space<vmem>>) attributes {dimension_semantics = [#tpu.dimension_semantics<parallel>], iteration_bounds = array<i64: 1>, scalar_prefetch = 0 : i64, scratch_operands = 0 : i64, tpu.core_type = #tpu.core_type<tc>, window_params = [{transform_indices = @transform_0, window_bounds = array<i64: 128, 128>}, {transform_indices = @transform_1, window_bounds = array<i64: 1, 128>}]} {
    %c0 = arith.constant 0 : index
    %c0_0 = arith.constant 0 : index
    %0 = vector.load %arg1[%c0, %c0_0] : memref<128x128xf32, #tpu.memory_space<vmem>>, vector<128x128xf32>
    %cst = arith.constant 1.000000e+00 : f32
    %1 = vector.broadcast %cst : f32 to vector<1x128xf32>
    %2 = arith.mulf %0, %0 : vector<128x128xf32>
    %cst_1 = arith.constant dense<0.000000e+00> : vector<1x128xf32>
    %3 = tpu.matmul %1, %2, %cst_1 {dimension_numbers = #tpu.dot_dimension_numbers<[1], [1], [0], [0], [0, 0, 1, 0], [], []>} : vector<1x128xf32>, vector<128x128xf32>, vector<1x128xf32> -> vector<1x128xf32>
    %cst_2 = arith.constant 1.000000e-24 : f32
    %4 = vector.broadcast %cst_2 : f32 to vector<1x128xf32>
    %5 = arith.maximumf %3, %4 : vector<1x128xf32>
    %6 = math.rsqrt %5 : vector<1x128xf32>
    %c0_3 = arith.constant 0 : index
    %c0_4 = arith.constant 0 : index
    %7 = vector.load %arg2[%c0_3, %c0_4] : memref<1x128xf32, #tpu.memory_space<vmem>>, vector<1x128xf32>
    tpu.vector_store %arg2[%c0_3, %c0_4], %6 {strides = array<i32>} : memref<1x128xf32, #tpu.memory_space<vmem>>, vector<1x128xf32>,
    return
  }
  func.func @transform_0(%arg0: i32) -> (i32, i32) {
    %c0_i32 = arith.constant 0 : i32
    %c0_i32_0 = arith.constant 0 : i32
    return %arg0, %c0_i32 : i32, i32
  }
  func.func @transform_1(%arg0: i32) -> (i32, i32) {
    %c0_i32 = arith.constant 0 : i32
    %c0_i32_0 = arith.constant 0 : i32
    return %c0_i32, %arg0 : i32, i32
  }
}

</mosaic_0001>

<llo_original>
// kernel: tpu_custom_call.1
$region0: #{tpu_custom_call.1}
  #allocation0 [shape = 'u32[]', space=smem, size = 0x4, offset = 0x4, fixed_abs, tag = 'smem constant byte address 0x4 - core index']
  #allocation1 [shape = 'u32[144,128]{1,0:T(1,128)}', space=vmem, size = 0x12000, scoped, tag = 'internal scratch']
  %s0 = inlined_call_operand.hbm [shape: f32[128,128], index: 0, kind: input, shape index: {}]
  %s1 = inlined_call_operand.hbm [shape: f32[1,128], index: 1, kind: output, shape index: {}]
  %s2 = sld [smem:[#allocation0]]
  $region18: #{tpu_custom_call.1} parent=0
    _
  %s4 = ssub.s32 1, %s2
  %s5 = scalar_select 0, %s4, %s2
  $region1: #{tpu_custom_call.1} parent=0
    #allocation2 [shape = 'u8[65536]{0}', space=vmem, size = 0x10000, scoped, tag = 'input window, operand 0, single buffered']
    #allocation3 [shape = 's32[1]{0}', space=sflag, size = 0x4, scoped, tag = 'scoped memory for tpu_custom_call.1']
    #allocation4 [shape = 's32[1]{0}', space=sflag, size = 0x4, scoped, tag = 'scoped memory for tpu_custom_call.1']
    #allocation5 [shape = 'u8[512]{0}', space=vmem, size = 0x400, scoped, tag = 'output window, operand 0, single buffered']
    %6 = vsyncpa [#allocation3], 0
    %7 = vsyncpa [#allocation4], 0
    // Predicated region
    $region2: #{tpu_custom_call.1} parent=1 // pred_check
      _
    $region3: #{tpu_custom_call.1} parent=1 // pred_check_branch
      %9 = sbr.rel (0) target = $region5
    $region4: #{tpu_custom_call.1} parent=1 // pred_region
      %s11 = ssub.s32 2048, 2048
      %12 = vsyncadd [#allocation3], %s11
      %s13 = sshll.u32 [#allocation2], 4
      %s14 = int_to_ptr.vmem [resolvable:$true] %s13
      %19 = dma.hbm_to_vmem [thread:$0]  %s0, 2048, %s14, [#allocation3], 128, 128, 8
    $region5: #{tpu_custom_call.1} parent=1 // pred_fallthru
      _
    // Predicated region
    $region6: #{tpu_custom_call.1} parent=1 // pred_check
      _
    $region7: #{tpu_custom_call.1} parent=1 // pred_check_branch
      %21 = sbr.rel (0) target = $region9
    $region8: #{tpu_custom_call.1} parent=1 // pred_region
      %22 = dma.done [#allocation3], 2048
    $region9: #{tpu_custom_call.1} parent=1 // pred_fallthru
      _
    %v23 = vld [vmem:[#allocation2] sm:$0xff]
    %v24 = vld [vmem:[#allocation2 + $0x8] sm:$0xff]
    %v25 = vld [vmem:[#allocation2 + $0x10] sm:$0xff]
    %v26 = vld [vmem:[#allocation2 + $0x18] sm:$0xff]
    %v27 = vld [vmem:[#allocation2 + $0x20] sm:$0xff]
    %v28 = vld [vmem:[#allocation2 + $0x28] sm:$0xff]
    %v29 = vld [vmem:[#allocation2 + $0x30] sm:$0xff]
    %v30 = vld [vmem:[#allocation2 + $0x38] sm:$0xff]
    %v31 = vld [vmem:[#allocation2 + $0x40] sm:$0xff]
    %v32 = vld [vmem:[#allocation2 + $0x48] sm:$0xff]
    %v33 = vld [vmem:[#allocation2 + $0x50] sm:$0xff]
    %v34 = vld [vmem:[#allocation2 + $0x58] sm:$0xff]
    %v35 = vld [vmem:[#allocation2 + $0x60] sm:$0xff]
    %v36 = vld [vmem:[#allocation2 + $0x68] sm:$0xff]
    %v37 = vld [vmem:[#allocation2 + $0x70] sm:$0xff]
    %v38 = vld [vmem:[#allocation2 + $0x78] sm:$0xff]
    %v39 = vmul.f32 %v23, %v23
    %v40 = vmul.f32 %v24, %v24
    %v41 = vmul.f32 %v25, %v25
    %v42 = vmul.f32 %v26, %v26
    %v43 = vmul.f32 %v27, %v27
    %v44 = vmul.f32 %v28, %v28
    %v45 = vmul.f32 %v29, %v29
    %v46 = vmul.f32 %v30, %v30
    %v47 = vmul.f32 %v31, %v31
    %v48 = vmul.f32 %v32, %v32
    %v49 = vmul.f32 %v33, %v33
    %v50 = vmul.f32 %v34, %v34
    %v51 = vmul.f32 %v35, %v35
    %v52 = vmul.f32 %v36, %v36
    %v53 = vmul.f32 %v37, %v37
    %v54 = vmul.f32 %v38, %v38
    %55 = vmatprep.subr.mxu0 0.0
    %56 = vmatpush1.xpose.msra.mxu0 %v39
    %57 = vmatprep.subr.mxu0 0.0
    %58 = vmatpush1.xpose.msra.mxu0 %v40
    %59 = vmatprep.subr.mxu0 0.0
    %60 = vmatpush1.xpose.msra.mxu0 %v41
    %61 = vmatprep.subr.mxu0 0.0
    %62 = vmatpush1.xpose.msra.mxu0 %v42
    %63 = vmatprep.subr.mxu0 0.0
    %64 = vmatpush1.xpose.msra.mxu0 %v43
    %65 = vmatprep.subr.mxu0 0.0
    %66 = vmatpush1.xpose.msra.mxu0 %v44
    %67 = vmatprep.subr.mxu0 0.0
    %68 = vmatpush1.xpose.msra.mxu0 %v45
    %69 = vmatprep.subr.mxu0 0.0
    %70 = vmatpush1.xpose.msra.mxu0 %v46
    %71 = vmatprep.subr.mxu0 0.0
    %72 = vmatpush1.xpose.msra.mxu0 %v47
    %73 = vmatprep.subr.mxu0 0.0
    %74 = vmatpush1.xpose.msra.mxu0 %v48
    %75 = vmatprep.subr.mxu0 0.0
    %76 = vmatpush1.xpose.msra.mxu0 %v49
    %77 = vmatprep.subr.mxu0 0.0
    %78 = vmatpush1.xpose.msra.mxu0 %v50
    %79 = vmatprep.subr.mxu0 0.0
    %80 = vmatpush1.xpose.msra.mxu0 %v51
    %81 = vmatprep.subr.mxu0 0.0
    %82 = vmatpush1.xpose.msra.mxu0 %v52
    %83 = vmatprep.subr.mxu0 0.0
    %84 = vmatpush1.xpose.msra.mxu0 %v53
    %85 = vmatprep.subr.mxu0 0.0
    %86 = vmatpush1.xpose.msra.mxu0 %v54
    %87 = vmatprep.subr.mxu0 0.0
    %88 = vmatpush1.xpose.msra.mxu0 0.0
    %89 = vmatprep.subr.mxu0 0.0
    %90 = vmatpush1.xpose.msra.mxu0 0.0
    %91 = vmatprep.subr.mxu0 0.0
    %92 = vmatpush1.xpose.msra.mxu0 0.0
    %93 = vmatprep.subr.mxu0 0.0
    %94 = vmatpush1.xpose.msra.mxu0 0.0
    %95 = vmatprep.subr.mxu0 0.0
    %96 = vmatpush1.xpose.msra.mxu0 0.0
    %97 = vmatprep.subr.mxu0 0.0
    %98 = vmatpush1.xpose.msra.mxu0 0.0
    %99 = vmatprep.subr.mxu0 0.0
    %100 = vmatpush1.xpose.msra.mxu0 0.0
    %101 = vmatprep.subr.mxu0 0.0
    %102 = vmatpush1.xpose.msra.mxu0 0.0
    %103 = vmatprep.subr.mxu0 0.0
    %104 = vmatpush1.xpose.msra.mxu0 0.0
    %105 = vmatprep.subr.mxu0 0.0
    %106 = vmatpush1.xpose.msra.mxu0 0.0
    %107 = vmatprep.subr.mxu0 0.0
    %108 = vmatpush1.xpose.msra.mxu0 0.0
    %109 = vmatprep.subr.mxu0 0.0
    %110 = vmatpush1.xpose.msra.mxu0 0.0
    %111 = vmatprep.subr.mxu0 0.0
    %112 = vmatpush1.xpose.msra.mxu0 0.0
    %113 = vmatprep.subr.mxu0 0.0
    %114 = vmatpush1.xpose.msra.mxu0 0.0
    %115 = vmatprep.subr.mxu0 0.0
    %116 = vmatpush1.xpose.msra.mxu0 0.0
    %117 = vmatprep.subr.mxu0 0.0
    %118 = vmatpush1.xpose.msra.mxu0 0.0
    %119 = vmatprep.mubr.f32.mxu0 0.0
    %120 = vmatmul.mubr.f32.gmra.mrb[0].mxu0 1.0
    %v121 = vpop.f32.mrb[0].mxu0
    %v122 = vadd.f32 0.0, %v121
    %v123 = vpop.f32.mrb[0].mxu0
    %124 = vdwg.mxu0
    %v125 = vmax.f32 %v122, 1e-24
    %v126 = vrsqrt.pop %v125
    %127 = vst [vmem:[#allocation5] sm:$0x1] %v126
    // Predicated region
    $region10: #{tpu_custom_call.1} parent=1 // pred_check
      _
    $region11: #{tpu_custom_call.1} parent=1 // pred_check_branch
      %129 = sbr.rel (0) target = $region13
    $region12: #{tpu_custom_call.1} parent=1 // pred_region
      %s131 = ssub.s32 16, 16
      %132 = vsyncadd [#allocation4], %s131
      %s134 = sshll.u32 [#allocation5], 4
      %s135 = int_to_ptr.vmem [resolvable:$true] %s134
      %137 = dma.vmem_to_hbm [thread:$0]  %s135, 16, %s1, [#allocation4]
    $region13: #{tpu_custom_call.1} parent=1 // pred_fallthru
      _
    // Predicated region
    $region14: #{tpu_custom_call.1} parent=1 // pred_check
      _
    $region15: #{tpu_custom_call.1} parent=1 // pred_check_branch
      %139 = sbr.rel (0) target = $region17
    $region16: #{tpu_custom_call.1} parent=1 // pred_region
      %140 = dma.done [#allocation4], 16
    $region17: #{tpu_custom_call.1} parent=1 // pred_fallthru
      _
    %141 = vsyncpa [#allocation3], 1
    %142 = vsyncpa [#allocation4], 1

</llo_original>
